<compile_context>
chip_gen: v7x
topology: tpu7x:2x2x1
jax: 0.10.0
libtpu: 0.0.40
codegen_flags: <defaults>
</compile_context>

<pallas_src>
import jax
import jax.numpy as jnp
from jax import lax
from jax.experimental import pallas as pl
from jax.experimental.pallas import tpu as pltpu

_SUBLANE = 8  # f32 sublane tile


def lstm_forward(x, w_ih, w_hh, b_ih, b_hh):
    """x: (T, B, ...) flattened to (T, B, F). Returns (1, B*F) like the module."""
    T, B = x.shape[0], x.shape[1]
    x2 = x.reshape(T, B, -1).astype(jnp.float32)              # (T, B, F)
    F = x2.shape[-1]
    Bp = max(_SUBLANE, ((B + _SUBLANE - 1) // _SUBLANE) * _SUBLANE)

    # Pad batch to the 8-sublane tile (padded rows are zero, dropped at the end).
    x_pad = jnp.zeros((T, Bp, F), jnp.float32).at[:, :B, :].set(x2)
    x_flat = x_pad.reshape(T * Bp, F)                          # (T*Bp, F), time-major

    # Gate-column permutation [i, f, g, o] -> [i, f, o, g]: sigmoid gates in
    # lanes [0, 3F), tanh gate in lanes [3F, 4F).
    perm = jnp.concatenate([jnp.arange(0, 2 * F),
                            jnp.arange(3 * F, 4 * F),
                            jnp.arange(2 * F, 3 * F)])
    wih_t = jnp.transpose(w_ih).astype(jnp.float32)[:, perm]   # (F, 4F)
    whh_t = jnp.transpose(w_hh).astype(jnp.float32)[:, perm]   # (F, 4F)
    bias = (b_ih + b_hh).astype(jnp.float32)[perm].reshape(1, 4 * F)

    def kernel(x_ref, wih_ref, whh_ref, b_ref, out_ref, gx_ref):
        # ---- Phase 1 (time-parallel): x-projection for ALL timesteps at once.
        # One (T*Bp, F) @ (F, 4F) MXU matmul, hoisted off the serial path.
        gx_ref[...] = (
            jnp.dot(x_ref[...], wih_ref[...], preferred_element_type=jnp.float32)
            + b_ref[...]                                       # (1, 4F) broadcast
        )

        whh = whh_ref[...]                                     # (F, 4F), loaded once
        # Sigmoid-vs-tanh lane mask, hoisted out of the recurrence.
        lane = lax.broadcasted_iota(jnp.int32, (Bp, 4 * F), 1)
        sig_lanes = lane < 3 * F

        def sigmoid_approx(v):
            # 1/(1+exp(-v)) via the approximate EUP reciprocal (vrcp): exp +
            # vrcp are EUP pushes in otherwise free bundle slots, no VPU
            # Newton-refined divide on the serial path.
            return pl.reciprocal(1.0 + jnp.exp(-v), approx=True)

        # ---- Phase 2 (sequential): recurrence, fully unrolled in-kernel.
        def step(t, carry):
            h, c = carry
            off = pl.multiple_of(t * Bp, Bp)                   # sublane-aligned read
            gates = gx_ref[pl.ds(off, Bp), :] + jnp.dot(
                h, whh, preferred_element_type=jnp.float32)    # (Bp, 4F) gate vreg
            # ONE merged activation pass over the whole gate vreg.
            act = jnp.where(sig_lanes, sigmoid_approx(gates), jnp.tanh(gates))
            # Peel the four F-wide slabs (lane selects ride XLU/VPU slots, not
            # the EUP).  Permuted order: [i, f, o, g].
            i = act[:, 0 * F:1 * F]
            f = act[:, 1 * F:2 * F]
            o = act[:, 2 * F:3 * F]
            g = act[:, 3 * F:4 * F]
            c_new = f * c + i * g
            h_new = o * jnp.tanh(c_new)
            return (h_new, c_new)

        h0 = jnp.zeros((Bp, F), jnp.float32)
        c0 = jnp.zeros((Bp, F), jnp.float32)
        h_last, _ = lax.fori_loop(0, T, step, (h0, c0), unroll=True)

        # out = relu(out[-1, :, :]); padded rows are sliced off in the wrapper.
        out_ref[...] = jnp.maximum(h_last, 0.0)

    # Grid-less single invocation: every operand is a whole-array VMEM block,
    # so the once-loaded weights get no pipeline double-buffers / semaphores.
    out = pl.pallas_call(
        kernel,
        out_shape=jax.ShapeDtypeStruct((Bp, F), jnp.float32),
        in_specs=[
            pl.BlockSpec(memory_space=pltpu.MemorySpace.VMEM),  # x      (T*Bp, F)
            pl.BlockSpec(memory_space=pltpu.MemorySpace.VMEM),  # W_ih^T (F, 4F)
            pl.BlockSpec(memory_space=pltpu.MemorySpace.VMEM),  # W_hh^T (F, 4F)
            pl.BlockSpec(memory_space=pltpu.MemorySpace.VMEM),  # bias   (1, 4F)
        ],
        out_specs=pl.BlockSpec(memory_space=pltpu.MemorySpace.VMEM),
        scratch_shapes=[pltpu.VMEM((T * Bp, 4 * F), jnp.float32)],  # gx scratch
    )(x_flat, wih_t, whh_t, bias)

    # Drop padded batch rows, then out.view(1, -1) as in the module.
    return out[:B].reshape(1, -1)


def lstm_reference(x, w_ih, w_hh, b_ih, b_hh):
    """Pure-JAX reference (PyTorch nn.LSTM equations) for validation."""
    T, B = x.shape[0], x.shape[1]
    x = x.reshape(T, B, -1).astype(jnp.float32)
    F = x.shape[-1]
    h = jnp.zeros((B, F), jnp.float32)
    c = jnp.zeros((B, F), jnp.float32)

    def step(carry, x_t):
        h, c = carry
        gates = x_t @ w_ih.T + h @ w_hh.T + b_ih + b_hh
        i = jax.nn.sigmoid(gates[:, 0 * F:1 * F])
        f = jax.nn.sigmoid(gates[:, 1 * F:2 * F])
        g = jnp.tanh(gates[:, 2 * F:3 * F])
        o = jax.nn.sigmoid(gates[:, 3 * F:4 * F])
        c = f * c + i * g
        h = o * jnp.tanh(c)
        return (h, c), None

    (h, c), _ = lax.scan(step, (h, c), x)
    return jnp.maximum(h, 0.0).reshape(1, -1)


if __name__ == "__main__":
    # Small shapes consistent with the module: num_features = 32 (= 4*8 spatial),
    # seq = 8, batch = 2.  x is (T, B, 4, 8) -> flattened to (T, B, 32).
    T, B, F = 8, 2, 32
    key = jax.random.PRNGKey(0)
    kx, k1, k2, k3, k4 = jax.random.split(key, 5)

    x = jax.random.normal(kx, (T, B, 4, 8), jnp.float32)

    # PyTorch-style uniform(-1/sqrt(H), 1/sqrt(H)) init, deterministic.
    bound = 1.0 / jnp.sqrt(jnp.float32(F))
    w_ih = jax.random.uniform(k1, (4 * F, F), jnp.float32, -bound, bound)
    w_hh = jax.random.uniform(k2, (4 * F, F), jnp.float32, -bound, bound)
    b_ih = jax.random.uniform(k3, (4 * F,), jnp.float32, -bound, bound)
    b_hh = jax.random.uniform(k4, (4 * F,), jnp.float32, -bound, bound)

    out = lstm_forward(x, w_ih, w_hh, b_ih, b_hh)
    out = jax.block_until_ready(out)

    ref = lstm_reference(x, w_ih, w_hh, b_ih, b_hh)
    assert out.shape == (1, B * F), out.shape
    # Tolerance widened vs. 1e-4/1e-5 because the sigmoid path uses the
    # approximate EUP reciprocal; with approx=False the kernel matches to ~1e-6.
    assert jnp.allclose(out, ref, rtol=2e-3, atol=2e-3), float(jnp.max(jnp.abs(out - ref)))

    print("KERNEL_OK")
</pallas_src>

<mosaic_0001>
module attributes {stable_mosaic.version = 11 : i64} {
  func.func @kernel(%arg0: memref<64x32xf32, #tpu.memory_space<vmem>>, %arg1: memref<32x128xf32, #tpu.memory_space<vmem>>, %arg2: memref<32x128xf32, #tpu.memory_space<vmem>>, %arg3: memref<1x128xf32, #tpu.memory_space<vmem>>, %arg4: memref<8x32xf32, #tpu.memory_space<vmem>>, %arg5: memref<64x128xf32, #tpu.memory_space<vmem>>) attributes {dimension_semantics = [], scalar_prefetch = 0 : i64, scratch_operands = 1 : i64, tpu.core_type = #tpu.core_type<tc>} {
    %c0 = arith.constant 0 : index
    %c0_0 = arith.constant 0 : index
    %0 = vector.load %arg0[%c0, %c0_0] : memref<64x32xf32, #tpu.memory_space<vmem>>, vector<64x32xf32>
    %c0_1 = arith.constant 0 : index
    %c0_2 = arith.constant 0 : index
    %1 = vector.load %arg1[%c0_1, %c0_2] : memref<32x128xf32, #tpu.memory_space<vmem>>, vector<32x128xf32>
    %cst = arith.constant dense<0.000000e+00> : vector<64x128xf32>
    %2 = tpu.matmul %0, %1, %cst {dimension_numbers = #tpu.dot_dimension_numbers<[1], [0], [0], [1], [0, 0, 1, 1], [], []>} : vector<64x32xf32>, vector<32x128xf32>, vector<64x128xf32> -> vector<64x128xf32>
    %c0_3 = arith.constant 0 : index
    %c0_4 = arith.constant 0 : index
    %3 = vector.load %arg3[%c0_3, %c0_4] : memref<1x128xf32, #tpu.memory_space<vmem>>, vector<1x128xf32>
    %4 = vector.broadcast %3 : vector<1x128xf32> to vector<64x128xf32>
    %5 = arith.addf %2, %4 : vector<64x128xf32>
    %c0_5 = arith.constant 0 : index
    %c0_6 = arith.constant 0 : index
    %6 = vector.load %arg5[%c0_5, %c0_6] : memref<64x128xf32, #tpu.memory_space<vmem>>, vector<64x128xf32>
    tpu.vector_store %arg5[%c0_5, %c0_6], %5 {strides = array<i32>} : memref<64x128xf32, #tpu.memory_space<vmem>>, vector<64x128xf32>,
    %c0_7 = arith.constant 0 : index
    %c0_8 = arith.constant 0 : index
    %7 = vector.load %arg2[%c0_7, %c0_8] : memref<32x128xf32, #tpu.memory_space<vmem>>, vector<32x128xf32>
    %8 = tpu.iota {dimensions = array<i32: 1>} : vector<8x128xi32>
    %c96_i32 = arith.constant 96 : i32
    %9 = vector.broadcast %c96_i32 : i32 to vector<8x128xi32>
    %10 = arith.cmpi slt, %8, %9 : vector<8x128xi32>
    %cst_9 = arith.constant 0.000000e+00 : f32
    %11 = vector.broadcast %cst_9 : f32 to vector<8x32xf32>
    %cst_10 = arith.constant 0.000000e+00 : f32
    %12 = vector.broadcast %cst_10 : f32 to vector<8x32xf32>
    %c0_i32 = arith.constant 0 : i32
    %c8_i32 = arith.constant 8 : i32
    %13 = arith.muli %c0_i32, %c8_i32 : i32
    %14 = tpu.assume_multiple %13, 8 : i32
    %15 = arith.index_cast %14 : i32 to index
    %c0_11 = arith.constant 0 : index
    %16 = vector.load %arg5[%15, %c0_11] : memref<64x128xf32, #tpu.memory_space<vmem>>, vector<8x128xf32>
    %cst_12 = arith.constant dense<0.000000e+00> : vector<8x128xf32>
    %17 = tpu.matmul %11, %7, %cst_12 {dimension_numbers = #tpu.dot_dimension_numbers<[1], [0], [0], [1], [0, 0, 1, 1], [], []>} : vector<8x32xf32>, vector<32x128xf32>, vector<8x128xf32> -> vector<8x128xf32>
    %18 = arith.addf %16, %17 : vector<8x128xf32>
    %cst_13 = arith.constant 0.000000e+00 : f32
    %19 = vector.broadcast %cst_13 : f32 to vector<8x128xf32>
    %20 = arith.subf %19, %18 : vector<8x128xf32>
    %21 = math.exp %20 : vector<8x128xf32>
    %cst_14 = arith.constant 1.000000e+00 : f32
    %22 = vector.broadcast %cst_14 : f32 to vector<8x128xf32>
    %23 = arith.addf %22, %21 : vector<8x128xf32>
    %24 = tpu.reciprocal %23 {approx = true} : vector<8x128xf32> -> vector<8x128xf32>
    %25 = math.tanh %18 : vector<8x128xf32>
    %26 = arith.select %10, %24, %25 : vector<8x128xi1>, vector<8x128xf32>
    %27 = vector.extract_strided_slice %26 {offsets = [0, 0], sizes = [8, 32], strides = [1, 1]} : vector<8x128xf32> to vector<8x32xf32>
    %28 = vector.extract_strided_slice %26 {offsets = [0, 32], sizes = [8, 32], strides = [1, 1]} : vector<8x128xf32> to vector<8x32xf32>
    %29 = vector.extract_strided_slice %26 {offsets = [0, 64], sizes = [8, 32], strides = [1, 1]} : vector<8x128xf32> to vector<8x32xf32>
    %30 = vector.extract_strided_slice %26 {offsets = [0, 96], sizes = [8, 32], strides = [1, 1]} : vector<8x128xf32> to vector<8x32xf32>
    %31 = arith.mulf %28, %12 : vector<8x32xf32>
    %32 = arith.mulf %27, %30 : vector<8x32xf32>
    %33 = arith.addf %31, %32 : vector<8x32xf32>
    %34 = math.tanh %33 : vector<8x32xf32>
    %35 = arith.mulf %29, %34 : vector<8x32xf32>
    %c1_i32 = arith.constant 1 : i32
    %c8_i32_15 = arith.constant 8 : i32
    %36 = arith.muli %c1_i32, %c8_i32_15 : i32
    %37 = tpu.assume_multiple %36, 8 : i32
    %38 = arith.index_cast %37 : i32 to index
    %c0_16 = arith.constant 0 : index
    %39 = vector.load %arg5[%38, %c0_16] : memref<64x128xf32, #tpu.memory_space<vmem>>, vector<8x128xf32>
    %cst_17 = arith.constant dense<0.000000e+00> : vector<8x128xf32>
    %40 = tpu.matmul %35, %7, %cst_17 {dimension_numbers = #tpu.dot_dimension_numbers<[1], [0], [0], [1], [0, 0, 1, 1], [], []>} : vector<8x32xf32>, vector<32x128xf32>, vector<8x128xf32> -> vector<8x128xf32>
    %41 = arith.addf %39, %40 : vector<8x128xf32>
    %cst_18 = arith.constant 0.000000e+00 : f32
    %42 = vector.broadcast %cst_18 : f32 to vector<8x128xf32>
    %43 = arith.subf %42, %41 : vector<8x128xf32>
    %44 = math.exp %43 : vector<8x128xf32>
    %cst_19 = arith.constant 1.000000e+00 : f32
    %45 = vector.broadcast %cst_19 : f32 to vector<8x128xf32>
    %46 = arith.addf %45, %44 : vector<8x128xf32>
    %47 = tpu.reciprocal %46 {approx = true} : vector<8x128xf32> -> vector<8x128xf32>
    %48 = math.tanh %41 : vector<8x128xf32>
    %49 = arith.select %10, %47, %48 : vector<8x128xi1>, vector<8x128xf32>
    %50 = vector.extract_strided_slice %49 {offsets = [0, 0], sizes = [8, 32], strides = [1, 1]} : vector<8x128xf32> to vector<8x32xf32>
    %51 = vector.extract_strided_slice %49 {offsets = [0, 32], sizes = [8, 32], strides = [1, 1]} : vector<8x128xf32> to vector<8x32xf32>
    %52 = vector.extract_strided_slice %49 {offsets = [0, 64], sizes = [8, 32], strides = [1, 1]} : vector<8x128xf32> to vector<8x32xf32>
    %53 = vector.extract_strided_slice %49 {offsets = [0, 96], sizes = [8, 32], strides = [1, 1]} : vector<8x128xf32> to vector<8x32xf32>
    %54 = arith.mulf %51, %33 : vector<8x32xf32>
    %55 = arith.mulf %50, %53 : vector<8x32xf32>
    %56 = arith.addf %54, %55 : vector<8x32xf32>
    %57 = math.tanh %56 : vector<8x32xf32>
    %58 = arith.mulf %52, %57 : vector<8x32xf32>
    %c2_i32 = arith.constant 2 : i32
    %c8_i32_20 = arith.constant 8 : i32
    %59 = arith.muli %c2_i32, %c8_i32_20 : i32
    %60 = tpu.assume_multiple %59, 8 : i32
    %61 = arith.index_cast %60 : i32 to index
    %c0_21 = arith.constant 0 : index
    %62 = vector.load %arg5[%61, %c0_21] : memref<64x128xf32, #tpu.memory_space<vmem>>, vector<8x128xf32>
    %cst_22 = arith.constant dense<0.000000e+00> : vector<8x128xf32>
    %63 = tpu.matmul %58, %7, %cst_22 {dimension_numbers = #tpu.dot_dimension_numbers<[1], [0], [0], [1], [0, 0, 1, 1], [], []>} : vector<8x32xf32>, vector<32x128xf32>, vector<8x128xf32> -> vector<8x128xf32>
    %64 = arith.addf %62, %63 : vector<8x128xf32>
    %cst_23 = arith.constant 0.000000e+00 : f32
    %65 = vector.broadcast %cst_23 : f32 to vector<8x128xf32>
    %66 = arith.subf %65, %64 : vector<8x128xf32>
    %67 = math.exp %66 : vector<8x128xf32>
    %cst_24 = arith.constant 1.000000e+00 : f32
    %68 = vector.broadcast %cst_24 : f32 to vector<8x128xf32>
    %69 = arith.addf %68, %67 : vector<8x128xf32>
    %70 = tpu.reciprocal %69 {approx = true} : vector<8x128xf32> -> vector<8x128xf32>
    %71 = math.tanh %64 : vector<8x128xf32>
    %72 = arith.select %10, %70, %71 : vector<8x128xi1>, vector<8x128xf32>
    %73 = vector.extract_strided_slice %72 {offsets = [0, 0], sizes = [8, 32], strides = [1, 1]} : vector<8x128xf32> to vector<8x32xf32>
    %74 = vector.extract_strided_slice %72 {offsets = [0, 32], sizes = [8, 32], strides = [1, 1]} : vector<8x128xf32> to vector<8x32xf32>
    %75 = vector.extract_strided_slice %72 {offsets = [0, 64], sizes = [8, 32], strides = [1, 1]} : vector<8x128xf32> to vector<8x32xf32>
    %76 = vector.extract_strided_slice %72 {offsets = [0, 96], sizes = [8, 32], strides = [1, 1]} : vector<8x128xf32> to vector<8x32xf32>
    %77 = arith.mulf %74, %56 : vector<8x32xf32>
    %78 = arith.mulf %73, %76 : vector<8x32xf32>
    %79 = arith.addf %77, %78 : vector<8x32xf32>
    %80 = math.tanh %79 : vector<8x32xf32>
    %81 = arith.mulf %75, %80 : vector<8x32xf32>
    %c3_i32 = arith.constant 3 : i32
    %c8_i32_25 = arith.constant 8 : i32
    %82 = arith.muli %c3_i32, %c8_i32_25 : i32
    %83 = tpu.assume_multiple %82, 8 : i32
    %84 = arith.index_cast %83 : i32 to index
    %c0_26 = arith.constant 0 : index
    %85 = vector.load %arg5[%84, %c0_26] : memref<64x128xf32, #tpu.memory_space<vmem>>, vector<8x128xf32>
    %cst_27 = arith.constant dense<0.000000e+00> : vector<8x128xf32>
    %86 = tpu.matmul %81, %7, %cst_27 {dimension_numbers = #tpu.dot_dimension_numbers<[1], [0], [0], [1], [0, 0, 1, 1], [], []>} : vector<8x32xf32>, vector<32x128xf32>, vector<8x128xf32> -> vector<8x128xf32>
    %87 = arith.addf %85, %86 : vector<8x128xf32>
    %cst_28 = arith.constant 0.000000e+00 : f32
    %88 = vector.broadcast %cst_28 : f32 to vector<8x128xf32>
    %89 = arith.subf %88, %87 : vector<8x128xf32>
    %90 = math.exp %89 : vector<8x128xf32>
    %cst_29 = arith.constant 1.000000e+00 : f32
    %91 = vector.broadcast %cst_29 : f32 to vector<8x128xf32>
    %92 = arith.addf %91, %90 : vector<8x128xf32>
    %93 = tpu.reciprocal %92 {approx = true} : vector<8x128xf32> -> vector<8x128xf32>
    %94 = math.tanh %87 : vector<8x128xf32>
    %95 = arith.select %10, %93, %94 : vector<8x128xi1>, vector<8x128xf32>
    %96 = vector.extract_strided_slice %95 {offsets = [0, 0], sizes = [8, 32], strides = [1, 1]} : vector<8x128xf32> to vector<8x32xf32>
    %97 = vector.extract_strided_slice %95 {offsets = [0, 32], sizes = [8, 32], strides = [1, 1]} : vector<8x128xf32> to vector<8x32xf32>
    %98 = vector.extract_strided_slice %95 {offsets = [0, 64], sizes = [8, 32], strides = [1, 1]} : vector<8x128xf32> to vector<8x32xf32>
    %99 = vector.extract_strided_slice %95 {offsets = [0, 96], sizes = [8, 32], strides = [1, 1]} : vector<8x128xf32> to vector<8x32xf32>
    %100 = arith.mulf %97, %79 : vector<8x32xf32>
    %101 = arith.mulf %96, %99 : vector<8x32xf32>
    %102 = arith.addf %100, %101 : vector<8x32xf32>
    %103 = math.tanh %102 : vector<8x32xf32>
    %104 = arith.mulf %98, %103 : vector<8x32xf32>
    %c4_i32 = arith.constant 4 : i32
    %c8_i32_30 = arith.constant 8 : i32
    %105 = arith.muli %c4_i32, %c8_i32_30 : i32
    %106 = tpu.assume_multiple %105, 8 : i32
    %107 = arith.index_cast %106 : i32 to index
    %c0_31 = arith.constant 0 : index
    %108 = vector.load %arg5[%107, %c0_31] : memref<64x128xf32, #tpu.memory_space<vmem>>, vector<8x128xf32>
    %cst_32 = arith.constant dense<0.000000e+00> : vector<8x128xf32>
    %109 = tpu.matmul %104, %7, %cst_32 {dimension_numbers = #tpu.dot_dimension_numbers<[1], [0], [0], [1], [0, 0, 1, 1], [], []>} : vector<8x32xf32>, vector<32x128xf32>, vector<8x128xf32> -> vector<8x128xf32>
    %110 = arith.addf %108, %109 : vector<8x128xf32>
    %cst_33 = arith.constant 0.000000e+00 : f32
    %111 = vector.broadcast %cst_33 : f32 to vector<8x128xf32>
    %112 = arith.subf %111, %110 : vector<8x128xf32>
    %113 = math.exp %112 : vector<8x128xf32>
    %cst_34 = arith.constant 1.000000e+00 : f32
    %114 = vector.broadcast %cst_34 : f32 to vector<8x128xf32>
    %115 = arith.addf %114, %113 : vector<8x128xf32>
    %116 = tpu.reciprocal %115 {approx = true} : vector<8x128xf32> -> vector<8x128xf32>
    %117 = math.tanh %110 : vector<8x128xf32>
    %118 = arith.select %10, %116, %117 : vector<8x128xi1>, vector<8x128xf32>
    %119 = vector.extract_strided_slice %118 {offsets = [0, 0], sizes = [8, 32], strides = [1, 1]} : vector<8x128xf32> to vector<8x32xf32>
    %120 = vector.extract_strided_slice %118 {offsets = [0, 32], sizes = [8, 32], strides = [1, 1]} : vector<8x128xf32> to vector<8x32xf32>
    %121 = vector.extract_strided_slice %118 {offsets = [0, 64], sizes = [8, 32], strides = [1, 1]} : vector<8x128xf32> to vector<8x32xf32>
    %122 = vector.extract_strided_slice %118 {offsets = [0, 96], sizes = [8, 32], strides = [1, 1]} : vector<8x128xf32> to vector<8x32xf32>
    %123 = arith.mulf %120, %102 : vector<8x32xf32>
    %124 = arith.mulf %119, %122 : vector<8x32xf32>
    %125 = arith.addf %123, %124 : vector<8x32xf32>
    %126 = math.tanh %125 : vector<8x32xf32>
    %127 = arith.mulf %121, %126 : vector<8x32xf32>
    %c5_i32 = arith.constant 5 : i32
    %c8_i32_35 = arith.constant 8 : i32
    %128 = arith.muli %c5_i32, %c8_i32_35 : i32
    %129 = tpu.assume_multiple %128, 8 : i32
    %130 = arith.index_cast %129 : i32 to index
    %c0_36 = arith.constant 0 : index
    %131 = vector.load %arg5[%130, %c0_36] : memref<64x128xf32, #tpu.memory_space<vmem>>, vector<8x128xf32>
    %cst_37 = arith.constant dense<0.000000e+00> : vector<8x128xf32>
    %132 = tpu.matmul %127, %7, %cst_37 {dimension_numbers = #tpu.dot_dimension_numbers<[1], [0], [0], [1], [0, 0, 1, 1], [], []>} : vector<8x32xf32>, vector<32x128xf32>, vector<8x128xf32> -> vector<8x128xf32>
    %133 = arith.addf %131, %132 : vector<8x128xf32>
    %cst_38 = arith.constant 0.000000e+00 : f32
    %134 = vector.broadcast %cst_38 : f32 to vector<8x128xf32>
    %135 = arith.subf %134, %133 : vector<8x128xf32>
    %136 = math.exp %135 : vector<8x128xf32>
    %cst_39 = arith.constant 1.000000e+00 : f32
    %137 = vector.broadcast %cst_39 : f32 to vector<8x128xf32>
    %138 = arith.addf %137, %136 : vector<8x128xf32>
    %139 = tpu.reciprocal %138 {approx = true} : vector<8x128xf32> -> vector<8x128xf32>
    %140 = math.tanh %133 : vector<8x128xf32>
    %141 = arith.select %10, %139, %140 : vector<8x128xi1>, vector<8x128xf32>
    %142 = vector.extract_strided_slice %141 {offsets = [0, 0], sizes = [8, 32], strides = [1, 1]} : vector<8x128xf32> to vector<8x32xf32>
    %143 = vector.extract_strided_slice %141 {offsets = [0, 32], sizes = [8, 32], strides = [1, 1]} : vector<8x128xf32> to vector<8x32xf32>
    %144 = vector.extract_strided_slice %141 {offsets = [0, 64], sizes = [8, 32], strides = [1, 1]} : vector<8x128xf32> to vector<8x32xf32>
    %145 = vector.extract_strided_slice %141 {offsets = [0, 96], sizes = [8, 32], strides = [1, 1]} : vector<8x128xf32> to vector<8x32xf32>
    %146 = arith.mulf %143, %125 : vector<8x32xf32>
    %147 = arith.mulf %142, %145 : vector<8x32xf32>
    %148 = arith.addf %146, %147 : vector<8x32xf32>
    %149 = math.tanh %148 : vector<8x32xf32>
    %150 = arith.mulf %144, %149 : vector<8x32xf32>
    %c6_i32 = arith.constant 6 : i32
    %c8_i32_40 = arith.constant 8 : i32
    %151 = arith.muli %c6_i32, %c8_i32_40 : i32
    %152 = tpu.assume_multiple %151, 8 : i32
    %153 = arith.index_cast %152 : i32 to index
    %c0_41 = arith.constant 0 : index
    %154 = vector.load %arg5[%153, %c0_41] : memref<64x128xf32, #tpu.memory_space<vmem>>, vector<8x128xf32>
    %cst_42 = arith.constant dense<0.000000e+00> : vector<8x128xf32>
    %155 = tpu.matmul %150, %7, %cst_42 {dimension_numbers = #tpu.dot_dimension_numbers<[1], [0], [0], [1], [0, 0, 1, 1], [], []>} : vector<8x32xf32>, vector<32x128xf32>, vector<8x128xf32> -> vector<8x128xf32>
    %156 = arith.addf %154, %155 : vector<8x128xf32>
    %cst_43 = arith.constant 0.000000e+00 : f32
    %157 = vector.broadcast %cst_43 : f32 to vector<8x128xf32>
    %158 = arith.subf %157, %156 : vector<8x128xf32>
    %159 = math.exp %158 : vector<8x128xf32>
    %cst_44 = arith.constant 1.000000e+00 : f32
    %160 = vector.broadcast %cst_44 : f32 to vector<8x128xf32>
    %161 = arith.addf %160, %159 : vector<8x128xf32>
    %162 = tpu.reciprocal %161 {approx = true} : vector<8x128xf32> -> vector<8x128xf32>
    %163 = math.tanh %156 : vector<8x128xf32>
    %164 = arith.select %10, %162, %163 : vector<8x128xi1>, vector<8x128xf32>
    %165 = vector.extract_strided_slice %164 {offsets = [0, 0], sizes = [8, 32], strides = [1, 1]} : vector<8x128xf32> to vector<8x32xf32>
    %166 = vector.extract_strided_slice %164 {offsets = [0, 32], sizes = [8, 32], strides = [1, 1]} : vector<8x128xf32> to vector<8x32xf32>
    %167 = vector.extract_strided_slice %164 {offsets = [0, 64], sizes = [8, 32], strides = [1, 1]} : vector<8x128xf32> to vector<8x32xf32>
    %168 = vector.extract_strided_slice %164 {offsets = [0, 96], sizes = [8, 32], strides = [1, 1]} : vector<8x128xf32> to vector<8x32xf32>
    %169 = arith.mulf %166, %148 : vector<8x32xf32>
    %170 = arith.mulf %165, %168 : vector<8x32xf32>
    %171 = arith.addf %169, %170 : vector<8x32xf32>
    %172 = math.tanh %171 : vector<8x32xf32>
    %173 = arith.mulf %167, %172 : vector<8x32xf32>
    %c7_i32 = arith.constant 7 : i32
    %c8_i32_45 = arith.constant 8 : i32
    %174 = arith.muli %c7_i32, %c8_i32_45 : i32
    %175 = tpu.assume_multiple %174, 8 : i32
    %176 = arith.index_cast %175 : i32 to index
    %c0_46 = arith.constant 0 : index
    %177 = vector.load %arg5[%176, %c0_46] : memref<64x128xf32, #tpu.memory_space<vmem>>, vector<8x128xf32>
    %cst_47 = arith.constant dense<0.000000e+00> : vector<8x128xf32>
    %178 = tpu.matmul %173, %7, %cst_47 {dimension_numbers = #tpu.dot_dimension_numbers<[1], [0], [0], [1], [0, 0, 1, 1], [], []>} : vector<8x32xf32>, vector<32x128xf32>, vector<8x128xf32> -> vector<8x128xf32>
    %179 = arith.addf %177, %178 : vector<8x128xf32>
    %cst_48 = arith.constant 0.000000e+00 : f32
    %180 = vector.broadcast %cst_48 : f32 to vector<8x128xf32>
    %181 = arith.subf %180, %179 : vector<8x128xf32>
    %182 = math.exp %181 : vector<8x128xf32>
    %cst_49 = arith.constant 1.000000e+00 : f32
    %183 = vector.broadcast %cst_49 : f32 to vector<8x128xf32>
    %184 = arith.addf %183, %182 : vector<8x128xf32>
    %185 = tpu.reciprocal %184 {approx = true} : vector<8x128xf32> -> vector<8x128xf32>
    %186 = math.tanh %179 : vector<8x128xf32>
    %187 = arith.select %10, %185, %186 : vector<8x128xi1>, vector<8x128xf32>
    %188 = vector.extract_strided_slice %187 {offsets = [0, 0], sizes = [8, 32], strides = [1, 1]} : vector<8x128xf32> to vector<8x32xf32>
    %189 = vector.extract_strided_slice %187 {offsets = [0, 32], sizes = [8, 32], strides = [1, 1]} : vector<8x128xf32> to vector<8x32xf32>
    %190 = vector.extract_strided_slice %187 {offsets = [0, 64], sizes = [8, 32], strides = [1, 1]} : vector<8x128xf32> to vector<8x32xf32>
    %191 = vector.extract_strided_slice %187 {offsets = [0, 96], sizes = [8, 32], strides = [1, 1]} : vector<8x128xf32> to vector<8x32xf32>
    %192 = arith.mulf %189, %171 : vector<8x32xf32>
    %193 = arith.mulf %188, %191 : vector<8x32xf32>
    %194 = arith.addf %192, %193 : vector<8x32xf32>
    %195 = math.tanh %194 : vector<8x32xf32>
    %196 = arith.mulf %190, %195 : vector<8x32xf32>
    %c8_i32_50 = arith.constant 8 : i32
    %cst_51 = arith.constant 0.000000e+00 : f32
    %197 = vector.broadcast %cst_51 : f32 to vector<8x32xf32>
    %198 = arith.maximumf %196, %197 : vector<8x32xf32>
    %c0_52 = arith.constant 0 : index
    %c0_53 = arith.constant 0 : index
    %199 = vector.load %arg4[%c0_52, %c0_53] : memref<8x32xf32, #tpu.memory_space<vmem>>, vector<8x32xf32>
    tpu.vector_store %arg4[%c0_52, %c0_53], %198 {strides = array<i32>} : memref<8x32xf32, #tpu.memory_space<vmem>>, vector<8x32xf32>,
    return
  }
}

</mosaic_0001>

<llo_original>
// kernel: tpu_custom_call.1
$region0: #{tpu_custom_call.1}
  #allocation0 [shape = 'u32[]', space=smem, size = 0x4, offset = 0x4, fixed_abs, tag = 'smem constant byte address 0x4 - core index']
  #allocation1 [shape = 'u32[144,128]{1,0:T(1,128)}', space=vmem, size = 0x12000, scoped, tag = 'internal scratch']
  #allocation2 [shape = 'f32[64,128]{1,0:T(8,128)}', space=vmem, size = 0x8000, scoped, tag = 'scratch operand']
  %s0 = inlined_call_operand.vmem [shape: f32[64,32], index: 0, kind: input, shape index: {}]
  %s1 = inlined_call_operand.vmem [shape: f32[32,128], index: 1, kind: input, shape index: {}]
  %s2 = inlined_call_operand.vmem [shape: f32[32,128], index: 2, kind: input, shape index: {}]
  %s3 = inlined_call_operand.vmem [shape: f32[1,128], index: 3, kind: input, shape index: {}]
  %s4 = inlined_call_operand.hbm [shape: f32[8,32], index: 4, kind: output, shape index: {}]
  %s5 = sld [smem:[#allocation0]]
  $region26: #{tpu_custom_call.1} parent=0
    _
  %s7 = ssub.s32 1, %s5
  %s8 = scalar_select 0, %s7, %s5
  $region1: #{tpu_custom_call.1} parent=0
    #allocation3 [shape = 'u8[4096]{0}', space=vmem, size = 0x1000, scoped, tag = 'output window, operand 0, single buffered']
    #allocation4 [shape = 's32[1]{0}', space=sflag, size = 0x4, scoped, tag = 'scoped memory for tpu_custom_call.1']
    %9 = vsyncpa [#allocation4], 0
    // Predicated region
    $region2: #{tpu_custom_call.1} parent=1 // pred_check
      _
    $region3: #{tpu_custom_call.1} parent=1 // pred_check_branch
      %11 = sbr.rel (0) target = $region5
    $region4: #{tpu_custom_call.1} parent=1 // pred_region
      _
    $region5: #{tpu_custom_call.1} parent=1 // pred_fallthru
      _
    // Predicated region
    $region6: #{tpu_custom_call.1} parent=1 // pred_check
      _
    $region7: #{tpu_custom_call.1} parent=1 // pred_check_branch
      %13 = sbr.rel (0) target = $region9
    $region8: #{tpu_custom_call.1} parent=1 // pred_region
      _
    $region9: #{tpu_custom_call.1} parent=1 // pred_fallthru
      _
    // Predicated region
    $region10: #{tpu_custom_call.1} parent=1 // pred_check
      _
    $region11: #{tpu_custom_call.1} parent=1 // pred_check_branch
      %15 = sbr.rel (0) target = $region13
    $region12: #{tpu_custom_call.1} parent=1 // pred_region
      _
    $region13: #{tpu_custom_call.1} parent=1 // pred_fallthru
      _
    // Predicated region
    $region14: #{tpu_custom_call.1} parent=1 // pred_check
      _
    $region15: #{tpu_custom_call.1} parent=1 // pred_check_branch
      %17 = sbr.rel (0) target = $region17
    $region16: #{tpu_custom_call.1} parent=1 // pred_region
      _
    $region17: #{tpu_custom_call.1} parent=1 // pred_fallthru
      _
    %v18 = vld [vmem:[%s0] sm:$0xff]
    %v19 = vld [vmem:[%s0 + $0x8] sm:$0xff]
    %v20 = vld [vmem:[%s0 + $0x10] sm:$0xff]
    %v21 = vld [vmem:[%s0 + $0x18] sm:$0xff]
    %v22 = vld [vmem:[%s0 + $0x20] sm:$0xff]
    %v23 = vld [vmem:[%s0 + $0x28] sm:$0xff]
    %v24 = vld [vmem:[%s0 + $0x30] sm:$0xff]
    %v25 = vld [vmem:[%s0 + $0x38] sm:$0xff]
    %v26 = vld [vmem:[%s1] sm:$0xff]
    %v27 = vld [vmem:[%s1 + $0x8] sm:$0xff]
    %v28 = vld [vmem:[%s1 + $0x10] sm:$0xff]
    %v29 = vld [vmem:[%s1 + $0x18] sm:$0xff]
    %v30 = vld [vmem:[%s3] sm:$0x1]
    %v32 = vlaneseq
    %v33 = vshrl.u32 %v32, 7
    %v34 = vsub.s32 0, %v33
    %v35 = vrot.slane %v30, %v34
    %vm37 = vcmask 261120
    %v39 = vsel %vm37, %v18, 0
    %v42 = vsel %vm37, %v19, 0
    %v45 = vsel %vm37, %v20, 0
    %v48 = vsel %vm37, %v21, 0
    %v51 = vsel %vm37, %v22, 0
    %v54 = vsel %vm37, %v23, 0
    %v57 = vsel %vm37, %v24, 0
    %v60 = vsel %vm37, %v25, 0
    %62 = vmatprep.subr.mxu0 0.0
    %63 = vmatpush1.msra.mxu0 %v26
    %64 = vmatprep.subr.mxu0 0.0
    %65 = vmatpush1.msra.mxu0 %v27
    %66 = vmatprep.subr.mxu0 0.0
    %67 = vmatpush1.msra.mxu0 %v28
    %68 = vmatprep.subr.mxu0 0.0
    %69 = vmatpush1.msra.mxu0 %v29
    %70 = vmatprep.subr.mxu0 0.0
    %71 = vmatpush1.msra.mxu0 0.0
    %72 = vmatprep.subr.mxu0 0.0
    %73 = vmatpush1.msra.mxu0 0.0
    %74 = vmatprep.subr.mxu0 0.0
    %75 = vmatpush1.msra.mxu0 0.0
    %76 = vmatprep.subr.mxu0 0.0
    %77 = vmatpush1.msra.mxu0 0.0
    %78 = vmatprep.subr.mxu0 0.0
    %79 = vmatpush1.msra.mxu0 0.0
    %80 = vmatprep.subr.mxu0 0.0
    %81 = vmatpush1.msra.mxu0 0.0
    %82 = vmatprep.subr.mxu0 0.0
    %83 = vmatpush1.msra.mxu0 0.0
    %84 = vmatprep.subr.mxu0 0.0
    %85 = vmatpush1.msra.mxu0 0.0
    %86 = vmatprep.subr.mxu0 0.0
    %87 = vmatpush1.msra.mxu0 0.0
    %88 = vmatprep.subr.mxu0 0.0
    %89 = vmatpush1.msra.mxu0 0.0
    %90 = vmatprep.subr.mxu0 0.0
    %91 = vmatpush1.msra.mxu0 0.0
    %92 = vmatprep.subr.mxu0 0.0
    %93 = vmatpush1.msra.mxu0 0.0
    %94 = vmatprep.subr.mxu0 0.0
    %95 = vmatpush1.msra.mxu0 0.0
    %96 = vmatprep.subr.mxu0 0.0
    %97 = vmatpush1.msra.mxu0 0.0
    %98 = vmatprep.subr.mxu0 0.0
    %99 = vmatpush1.msra.mxu0 0.0
    %100 = vmatprep.subr.mxu0 0.0
    %101 = vmatpush1.msra.mxu0 0.0
    %102 = vmatprep.subr.mxu0 0.0
    %103 = vmatpush1.msra.mxu0 0.0
    %104 = vmatprep.subr.mxu0 0.0
    %105 = vmatpush1.msra.mxu0 0.0
    %106 = vmatprep.subr.mxu0 0.0
    %107 = vmatpush1.msra.mxu0 0.0
    %108 = vmatprep.subr.mxu0 0.0
    %109 = vmatpush1.msra.mxu0 0.0
    %110 = vmatprep.subr.mxu0 0.0
    %111 = vmatpush1.msra.mxu0 0.0
    %112 = vmatprep.subr.mxu0 0.0
    %113 = vmatpush1.msra.mxu0 0.0
    %114 = vmatprep.subr.mxu0 0.0
    %115 = vmatpush1.msra.mxu0 0.0
    %116 = vmatprep.subr.mxu0 0.0
    %117 = vmatpush1.msra.mxu0 0.0
    %118 = vmatprep.subr.mxu0 0.0
    %119 = vmatpush1.msra.mxu0 0.0
    %120 = vmatprep.subr.mxu0 0.0
    %121 = vmatpush1.msra.mxu0 0.0
    %122 = vmatprep.subr.mxu0 0.0
    %123 = vmatpush1.msra.mxu0 0.0
    %124 = vmatprep.subr.mxu0 0.0
    %125 = vmatpush1.msra.mxu0 0.0
    %126 = vmatprep.mubr.f32.mxu0 0.0
    %127 = vmatmul.mubr.f32.gmra.mrb[0].mxu0 %v39
    %v128 = vpop.f32.mrb[0].mxu0
    %v129 = vadd.f32 %v35, %v128
    %v130 = vpop.f32.mrb[0].mxu0
    %131 = vmatprep.mubr.f32.mxu0 0.0
    %132 = vmatmul.mubr.f32.gmra.mrb[0].mxu0 %v42
    %v133 = vpop.f32.mrb[0].mxu0
    %v134 = vadd.f32 %v35, %v133
    %v135 = vpop.f32.mrb[0].mxu0
    %136 = vmatprep.mubr.f32.mxu0 0.0
    %137 = vmatmul.mubr.f32.gmra.mrb[0].mxu0 %v45
    %v138 = vpop.f32.mrb[0].mxu0
    %v139 = vadd.f32 %v35, %v138
    %v140 = vpop.f32.mrb[0].mxu0
    %141 = vmatprep.mubr.f32.mxu0 0.0
    %142 = vmatmul.mubr.f32.gmra.mrb[0].mxu0 %v48
    %v143 = vpop.f32.mrb[0].mxu0
    %v144 = vadd.f32 %v35, %v143
    %v145 = vpop.f32.mrb[0].mxu0
    %146 = vmatprep.mubr.f32.mxu0 0.0
    %147 = vmatmul.mubr.f32.gmra.mrb[0].mxu0 %v51
    %v148 = vpop.f32.mrb[0].mxu0
    %v149 = vadd.f32 %v35, %v148
    %v150 = vpop.f32.mrb[0].mxu0
    %151 = vmatprep.mubr.f32.mxu0 0.0
    %152 = vmatmul.mubr.f32.gmra.mrb[0].mxu0 %v54
    %v153 = vpop.f32.mrb[0].mxu0
    %v154 = vadd.f32 %v35, %v153
    %v155 = vpop.f32.mrb[0].mxu0
    %156 = vmatprep.mubr.f32.mxu0 0.0
    %157 = vmatmul.mubr.f32.gmra.mrb[0].mxu0 %v57
    %v158 = vpop.f32.mrb[0].mxu0
    %v159 = vadd.f32 %v35, %v158
    %v160 = vpop.f32.mrb[0].mxu0
    %161 = vmatprep.mubr.f32.mxu0 0.0
    %162 = vmatmul.mubr.f32.gmra.mrb[0].mxu0 %v60
    %v163 = vpop.f32.mrb[0].mxu0
    %v164 = vadd.f32 %v35, %v163
    %v165 = vpop.f32.mrb[0].mxu0
    %166 = vdwg.mxu0
    %167 = vst [vmem:[#allocation2] sm:$0xff] %v129
    %168 = vst [vmem:[#allocation2 + $0x8] sm:$0xff] %v134
    %169 = vst [vmem:[#allocation2 + $0x10] sm:$0xff] %v139
    %170 = vst [vmem:[#allocation2 + $0x18] sm:$0xff] %v144
    %171 = vst [vmem:[#allocation2 + $0x20] sm:$0xff] %v149
    %172 = vst [vmem:[#allocation2 + $0x28] sm:$0xff] %v154
    %173 = vst [vmem:[#allocation2 + $0x30] sm:$0xff] %v159
    %174 = vst [vmem:[#allocation2 + $0x38] sm:$0xff] %v164
    %v175 = vld [vmem:[%s2] sm:$0xff]
    %v176 = vld [vmem:[%s2 + $0x8] sm:$0xff]
    %v177 = vld [vmem:[%s2 + $0x10] sm:$0xff]
    %v178 = vld [vmem:[%s2 + $0x18] sm:$0xff]
    %v179 = vlaneseq
    %v180 = vand.u32 %v179, 127
    %vm181 = vcmp.lt.s32.totalorder %v180, 96
    %v182 = vld [vmem:[#allocation2] sm:$0xff]
    %v184 = vsel %vm37, 0.0, 0
    %186 = vmatprep.subr.mxu0 0.0
    %187 = vmatpush1.msra.mxu0 %v175
    %188 = vmatprep.subr.mxu0 0.0
    %189 = vmatpush1.msra.mxu0 %v176
    %190 = vmatprep.subr.mxu0 0.0
    %191 = vmatpush1.msra.mxu0 %v177
    %192 = vmatprep.subr.mxu0 0.0
    %193 = vmatpush1.msra.mxu0 %v178
    %194 = vmatprep.subr.mxu0 0.0
    %195 = vmatpush1.msra.mxu0 0.0
    %196 = vmatprep.subr.mxu0 0.0
    %197 = vmatpush1.msra.mxu0 0.0
    %198 = vmatprep.subr.mxu0 0.0
    %199 = vmatpush1.msra.mxu0 0.0
    %200 = vmatprep.subr.mxu0 0.0
    %201 = vmatpush1.msra.mxu0 0.0
    %202 = vmatprep.subr.mxu0 0.0
    %203 = vmatpush1.msra.mxu0 0.0
    %204 = vmatprep.subr.mxu0 0.0
    %205 = vmatpush1.msra.mxu0 0.0
    %206 = vmatprep.subr.mxu0 0.0
    %207 = vmatpush1.msra.mxu0 0.0
    %208 = vmatprep.subr.mxu0 0.0
    %209 = vmatpush1.msra.mxu0 0.0
    %210 = vmatprep.subr.mxu0 0.0
    %211 = vmatpush1.msra.mxu0 0.0
    %212 = vmatprep.subr.mxu0 0.0
    %213 = vmatpush1.msra.mxu0 0.0
    %214 = vmatprep.subr.mxu0 0.0
    %215 = vmatpush1.msra.mxu0 0.0
    %216 = vmatprep.subr.mxu0 0.0
    %217 = vmatpush1.msra.mxu0 0.0
    %218 = vmatprep.subr.mxu0 0.0
    %219 = vmatpush1.msra.mxu0 0.0
    %220 = vmatprep.subr.mxu0 0.0
    %221 = vmatpush1.msra.mxu0 0.0
    %222 = vmatprep.subr.mxu0 0.0
    %223 = vmatpush1.msra.mxu0 0.0
    %224 = vmatprep.subr.mxu0 0.0
    %225 = vmatpush1.msra.mxu0 0.0
    %226 = vmatprep.subr.mxu0 0.0
    %227 = vmatpush1.msra.mxu0 0.0
    %228 = vmatprep.subr.mxu0 0.0
    %229 = vmatpush1.msra.mxu0 0.0
    %230 = vmatprep.subr.mxu0 0.0
    %231 = vmatpush1.msra.mxu0 0.0
    %232 = vmatprep.subr.mxu0 0.0
    %233 = vmatpush1.msra.mxu0 0.0
    %234 = vmatprep.subr.mxu0 0.0
    %235 = vmatpush1.msra.mxu0 0.0
    %236 = vmatprep.subr.mxu0 0.0
    %237 = vmatpush1.msra.mxu0 0.0
    %238 = vmatprep.subr.mxu0 0.0
    %239 = vmatpush1.msra.mxu0 0.0
    %240 = vmatprep.subr.mxu0 0.0
    %241 = vmatpush1.msra.mxu0 0.0
    %242 = vmatprep.subr.mxu0 0.0
    %243 = vmatpush1.msra.mxu0 0.0
    %244 = vmatprep.subr.mxu0 0.0
    %245 = vmatpush1.msra.mxu0 0.0
    %246 = vmatprep.subr.mxu0 0.0
    %247 = vmatpush1.msra.mxu0 0.0
    %248 = vmatprep.subr.mxu0 0.0
    %249 = vmatpush1.msra.mxu0 0.0
    %250 = vmatprep.mubr.f32.mxu0 0.0
    %251 = vmatmul.mubr.f32.gmra.mrb[0].mxu0 %v184
    %v252 = vpop.f32.mrb[0].mxu0
    %v253 = vadd.f32 0.0, %v252
    %v254 = vpop.f32.mrb[0].mxu0
    %255 = vdwg.mxu0
    %v256 = vadd.f32 %v182, %v253
    %v257 = vsub.f32 0.0, %v256
    %v258 = vmul.f32 %v257, 1.442695
    %v259 = vpow.pop %v258
    %v260 = vadd.f32 %v259, 1.0
    %v261 = vrcp.pop %v260
    %v262 = vtanh.pop %v256
    %v263 = vsel %vm181, %v261, %v262
    %v264 = vmul.f32 %v263, 0.0
    %266 = vrot.lane.b32.xlu0 %v263, 32
    %v267 = vpop.permute.xlu0 %266
    %v269 = vmul.f32 %v263, %v267
    %271 = vrot.lane.b32.xlu0 %v269, 32
    %v272 = vpop.permute.xlu0 %271
    %v274 = vadd.f32 %v264, %v272
    %v275 = vtanh.pop %v274
    %277 = vrot.lane.b32.xlu0 %v275, 32
    %v278 = vpop.permute.xlu0 %277
    %v280 = vmul.f32 %v263, %v278
    %s281 = scalar_lea.vmem [#allocation2], 8
    %v282 = vld [vmem:[%s281] sm:$0xff]
    %284 = vrot.lane.b32.xlu0 %v280, 64
    %v285 = vpop.permute.xlu0 %284
    %v286 = vsel %vm37, %v285, 0
    %288 = vmatprep.subr.mxu0 0.0
    %289 = vmatpush1.msra.mxu0 %v175
    %290 = vmatprep.subr.mxu0 0.0
    %291 = vmatpush1.msra.mxu0 %v176
    %292 = vmatprep.subr.mxu0 0.0
    %293 = vmatpush1.msra.mxu0 %v177
    %294 = vmatprep.subr.mxu0 0.0
    %295 = vmatpush1.msra.mxu0 %v178
    %296 = vmatprep.subr.mxu0 0.0
    %297 = vmatpush1.msra.mxu0 0.0
    %298 = vmatprep.subr.mxu0 0.0
    %299 = vmatpush1.msra.mxu0 0.0
    %300 = vmatprep.subr.mxu0 0.0
    %301 = vmatpush1.msra.mxu0 0.0
    %302 = vmatprep.subr.mxu0 0.0
    %303 = vmatpush1.msra.mxu0 0.0
    %304 = vmatprep.subr.mxu0 0.0
    %305 = vmatpush1.msra.mxu0 0.0
    %306 = vmatprep.subr.mxu0 0.0
    %307 = vmatpush1.msra.mxu0 0.0
    %308 = vmatprep.subr.mxu0 0.0
    %309 = vmatpush1.msra.mxu0 0.0
    %310 = vmatprep.subr.mxu0 0.0
    %311 = vmatpush1.msra.mxu0 0.0
    %312 = vmatprep.subr.mxu0 0.0
    %313 = vmatpush1.msra.mxu0 0.0
    %314 = vmatprep.subr.mxu0 0.0
    %315 = vmatpush1.msra.mxu0 0.0
    %316 = vmatprep.subr.mxu0 0.0
    %317 = vmatpush1.msra.mxu0 0.0
    %318 = vmatprep.subr.mxu0 0.0
    %319 = vmatpush1.msra.mxu0 0.0
    %320 = vmatprep.subr.mxu0 0.0
    %321 = vmatpush1.msra.mxu0 0.0
    %322 = vmatprep.subr.mxu0 0.0
    %323 = vmatpush1.msra.mxu0 0.0
    %324 = vmatprep.subr.mxu0 0.0
    %325 = vmatpush1.msra.mxu0 0.0
    %326 = vmatprep.subr.mxu0 0.0
    %327 = vmatpush1.msra.mxu0 0.0
    %328 = vmatprep.subr.mxu0 0.0
    %329 = vmatpush1.msra.mxu0 0.0
    %330 = vmatprep.subr.mxu0 0.0
    %331 = vmatpush1.msra.mxu0 0.0
    %332 = vmatprep.subr.mxu0 0.0
    %333 = vmatpush1.msra.mxu0 0.0
    %334 = vmatprep.subr.mxu0 0.0
    %335 = vmatpush1.msra.mxu0 0.0
    %336 = vmatprep.subr.mxu0 0.0
    %337 = vmatpush1.msra.mxu0 0.0
    %338 = vmatprep.subr.mxu0 0.0
    %339 = vmatpush1.msra.mxu0 0.0
    %340 = vmatprep.subr.mxu0 0.0
    %341 = vmatpush1.msra.mxu0 0.0
    %342 = vmatprep.subr.mxu0 0.0
    %343 = vmatpush1.msra.mxu0 0.0
    %344 = vmatprep.subr.mxu0 0.0
    %345 = vmatpush1.msra.mxu0 0.0
    %346 = vmatprep.subr.mxu0 0.0
    %347 = vmatpush1.msra.mxu0 0.0
    %348 = vmatprep.subr.mxu0 0.0
    %349 = vmatpush1.msra.mxu0 0.0
    %350 = vmatprep.subr.mxu0 0.0
    %351 = vmatpush1.msra.mxu0 0.0
    %352 = vmatprep.mubr.f32.mxu0 0.0
    %353 = vmatmul.mubr.f32.gmra.mrb[0].mxu0 %v286
    %v354 = vpop.f32.mrb[0].mxu0
    %v355 = vadd.f32 0.0, %v354
    %v356 = vpop.f32.mrb[0].mxu0
    %357 = vdwg.mxu0
    %v358 = vadd.f32 %v282, %v355
    %v359 = vsub.f32 0.0, %v358
    %v360 = vmul.f32 %v359, 1.442695
    %v361 = vpow.pop %v360
    %v362 = vadd.f32 %v361, 1.0
    %v363 = vrcp.pop %v362
    %v364 = vtanh.pop %v358
    %v365 = vsel %vm181, %v363, %v364
    %v366 = vmul.f32 %v365, %v274
    %368 = vrot.lane.b32.xlu0 %v365, 32
    %v369 = vpop.permute.xlu0 %368
    %v371 = vmul.f32 %v365, %v369
    %373 = vrot.lane.b32.xlu0 %v371, 32
    %v374 = vpop.permute.xlu0 %373
    %v376 = vadd.f32 %v366, %v374
    %v377 = vtanh.pop %v376
    %379 = vrot.lane.b32.xlu0 %v377, 32
    %v380 = vpop.permute.xlu0 %379
    %v382 = vmul.f32 %v365, %v380
    %s383 = scalar_lea.vmem [#allocation2], 16
    %v384 = vld [vmem:[%s383] sm:$0xff]
    %386 = vrot.lane.b32.xlu0 %v382, 64
    %v387 = vpop.permute.xlu0 %386
    %v388 = vsel %vm37, %v387, 0
    %390 = vmatprep.subr.mxu0 0.0
    %391 = vmatpush1.msra.mxu0 %v175
    %392 = vmatprep.subr.mxu0 0.0
    %393 = vmatpush1.msra.mxu0 %v176
    %394 = vmatprep.subr.mxu0 0.0
    %395 = vmatpush1.msra.mxu0 %v177
    %396 = vmatprep.subr.mxu0 0.0
    %397 = vmatpush1.msra.mxu0 %v178
    %398 = vmatprep.subr.mxu0 0.0
    %399 = vmatpush1.msra.mxu0 0.0
    %400 = vmatprep.subr.mxu0 0.0
    %401 = vmatpush1.msra.mxu0 0.0
    %402 = vmatprep.subr.mxu0 0.0
    %403 = vmatpush1.msra.mxu0 0.0
    %404 = vmatprep.subr.mxu0 0.0
    %405 = vmatpush1.msra.mxu0 0.0
    %406 = vmatprep.subr.mxu0 0.0
    %407 = vmatpush1.msra.mxu0 0.0
    %408 = vmatprep.subr.mxu0 0.0
    %409 = vmatpush1.msra.mxu0 0.0
    %410 = vmatprep.subr.mxu0 0.0
    %411 = vmatpush1.msra.mxu0 0.0
    %412 = vmatprep.subr.mxu0 0.0
    %413 = vmatpush1.msra.mxu0 0.0
    %414 = vmatprep.subr.mxu0 0.0
    %415 = vmatpush1.msra.mxu0 0.0
    %416 = vmatprep.subr.mxu0 0.0
    %417 = vmatpush1.msra.mxu0 0.0
    %418 = vmatprep.subr.mxu0 0.0
    %419 = vmatpush1.msra.mxu0 0.0
    %420 = vmatprep.subr.mxu0 0.0
    %421 = vmatpush1.msra.mxu0 0.0
    %422 = vmatprep.subr.mxu0 0.0
    %423 = vmatpush1.msra.mxu0 0.0
    %424 = vmatprep.subr.mxu0 0.0
    %425 = vmatpush1.msra.mxu0 0.0
    %426 = vmatprep.subr.mxu0 0.0
    %427 = vmatpush1.msra.mxu0 0.0
    %428 = vmatprep.subr.mxu0 0.0
    %429 = vmatpush1.msra.mxu0 0.0
    %430 = vmatprep.subr.mxu0 0.0
    %431 = vmatpush1.msra.mxu0 0.0
    %432 = vmatprep.subr.mxu0 0.0
    %433 = vmatpush1.msra.mxu0 0.0
    %434 = vmatprep.subr.mxu0 0.0
    %435 = vmatpush1.msra.mxu0 0.0
    %436 = vmatprep.subr.mxu0 0.0
    %437 = vmatpush1.msra.mxu0 0.0
    %438 = vmatprep.subr.mxu0 0.0
    %439 = vmatpush1.msra.mxu0 0.0
    %440 = vmatprep.subr.mxu0 0.0
    %441 = vmatpush1.msra.mxu0 0.0
    %442 = vmatprep.subr.mxu0 0.0
    %443 = vmatpush1.msra.mxu0 0.0
    %444 = vmatprep.subr.mxu0 0.0
    %445 = vmatpush1.msra.mxu0 0.0
    %446 = vmatprep.subr.mxu0 0.0
    %447 = vmatpush1.msra.mxu0 0.0
    %448 = vmatprep.subr.mxu0 0.0
    %449 = vmatpush1.msra.mxu0 0.0
    %450 = vmatprep.subr.mxu0 0.0
    %451 = vmatpush1.msra.mxu0 0.0
    %452 = vmatprep.subr.mxu0 0.0
    %453 = vmatpush1.msra.mxu0 0.0
    %454 = vmatprep.mubr.f32.mxu0 0.0
    %455 = vmatmul.mubr.f32.gmra.mrb[0].mxu0 %v388
    %v456 = vpop.f32.mrb[0].mxu0
    %v457 = vadd.f32 0.0, %v456
    %v458 = vpop.f32.mrb[0].mxu0
    %459 = vdwg.mxu0
    %v460 = vadd.f32 %v384, %v457
    %v461 = vsub.f32 0.0, %v460
    %v462 = vmul.f32 %v461, 1.442695
    %v463 = vpow.pop %v462
    %v464 = vadd.f32 %v463, 1.0
    %v465 = vrcp.pop %v464
    %v466 = vtanh.pop %v460
    %v467 = vsel %vm181, %v465, %v466
    %v468 = vmul.f32 %v467, %v376
    %470 = vrot.lane.b32.xlu0 %v467, 32
    %v471 = vpop.permute.xlu0 %470
    %v473 = vmul.f32 %v467, %v471
    %475 = vrot.lane.b32.xlu0 %v473, 32
    %v476 = vpop.permute.xlu0 %475
    %v478 = vadd.f32 %v468, %v476
    %v479 = vtanh.pop %v478
    %481 = vrot.lane.b32.xlu0 %v479, 32
    %v482 = vpop.permute.xlu0 %481
    %v484 = vmul.f32 %v467, %v482
    %s485 = scalar_lea.vmem [#allocation2], 24
    %v486 = vld [vmem:[%s485] sm:$0xff]
    %488 = vrot.lane.b32.xlu0 %v484, 64
    %v489 = vpop.permute.xlu0 %488
    %v490 = vsel %vm37, %v489, 0
    %492 = vmatprep.subr.mxu0 0.0
    %493 = vmatpush1.msra.mxu0 %v175
    %494 = vmatprep.subr.mxu0 0.0
    %495 = vmatpush1.msra.mxu0 %v176
    %496 = vmatprep.subr.mxu0 0.0
    %497 = vmatpush1.msra.mxu0 %v177
    %498 = vmatprep.subr.mxu0 0.0
    %499 = vmatpush1.msra.mxu0 %v178
    %500 = vmatprep.subr.mxu0 0.0
    %501 = vmatpush1.msra.mxu0 0.0
    %502 = vmatprep.subr.mxu0 0.0
    %503 = vmatpush1.msra.mxu0 0.0
    %504 = vmatprep.subr.mxu0 0.0
    %505 = vmatpush1.msra.mxu0 0.0
    %506 = vmatprep.subr.mxu0 0.0
    %507 = vmatpush1.msra.mxu0 0.0
    %508 = vmatprep.subr.mxu0 0.0
    %509 = vmatpush1.msra.mxu0 0.0
    %510 = vmatprep.subr.mxu0 0.0
    %511 = vmatpush1.msra.mxu0 0.0
    %512 = vmatprep.subr.mxu0 0.0
    %513 = vmatpush1.msra.mxu0 0.0
    %514 = vmatprep.subr.mxu0 0.0
    %515 = vmatpush1.msra.mxu0 0.0
    %516 = vmatprep.subr.mxu0 0.0
    %517 = vmatpush1.msra.mxu0 0.0
    %518 = vmatprep.subr.mxu0 0.0
    %519 = vmatpush1.msra.mxu0 0.0
    %520 = vmatprep.subr.mxu0 0.0
    %521 = vmatpush1.msra.mxu0 0.0
    %522 = vmatprep.subr.mxu0 0.0
    %523 = vmatpush1.msra.mxu0 0.0
    %524 = vmatprep.subr.mxu0 0.0
    %525 = vmatpush1.msra.mxu0 0.0
    %526 = vmatprep.subr.mxu0 0.0
    %527 = vmatpush1.msra.mxu0 0.0
    %528 = vmatprep.subr.mxu0 0.0
    %529 = vmatpush1.msra.mxu0 0.0
    %530 = vmatprep.subr.mxu0 0.0
    %531 = vmatpush1.msra.mxu0 0.0
    %532 = vmatprep.subr.mxu0 0.0
    %533 = vmatpush1.msra.mxu0 0.0
    %534 = vmatprep.subr.mxu0 0.0
    %535 = vmatpush1.msra.mxu0 0.0
    %536 = vmatprep.subr.mxu0 0.0
    %537 = vmatpush1.msra.mxu0 0.0
    %538 = vmatprep.subr.mxu0 0.0
    %539 = vmatpush1.msra.mxu0 0.0
    %540 = vmatprep.subr.mxu0 0.0
    %541 = vmatpush1.msra.mxu0 0.0
    %542 = vmatprep.subr.mxu0 0.0
    %543 = vmatpush1.msra.mxu0 0.0
    %544 = vmatprep.subr.mxu0 0.0
    %545 = vmatpush1.msra.mxu0 0.0
    %546 = vmatprep.subr.mxu0 0.0
    %547 = vmatpush1.msra.mxu0 0.0
    %548 = vmatprep.subr.mxu0 0.0
    %549 = vmatpush1.msra.mxu0 0.0
    %550 = vmatprep.subr.mxu0 0.0
    %551 = vmatpush1.msra.mxu0 0.0
    %552 = vmatprep.subr.mxu0 0.0
    %553 = vmatpush1.msra.mxu0 0.0
    %554 = vmatprep.subr.mxu0 0.0
    %555 = vmatpush1.msra.mxu0 0.0
    %556 = vmatprep.mubr.f32.mxu0 0.0
    %557 = vmatmul.mubr.f32.gmra.mrb[0].mxu0 %v490
    %v558 = vpop.f32.mrb[0].mxu0
    %v559 = vadd.f32 0.0, %v558
    %v560 = vpop.f32.mrb[0].mxu0
    %561 = vdwg.mxu0
    %v562 = vadd.f32 %v486, %v559
    %v563 = vsub.f32 0.0, %v562
    %v564 = vmul.f32 %v563, 1.442695
    %v565 = vpow.pop %v564
    %v566 = vadd.f32 %v565, 1.0
    %v567 = vrcp.pop %v566
    %v568 = vtanh.pop %v562
    %v569 = vsel %vm181, %v567, %v568
    %v570 = vmul.f32 %v569, %v478
    %572 = vrot.lane.b32.xlu0 %v569, 32
    %v573 = vpop.permute.xlu0 %572
    %v575 = vmul.f32 %v569, %v573
    %577 = vrot.lane.b32.xlu0 %v575, 32
    %v578 = vpop.permute.xlu0 %577
    %v580 = vadd.f32 %v570, %v578
    %v581 = vtanh.pop %v580
    %583 = vrot.lane.b32.xlu0 %v581, 32
    %v584 = vpop.permute.xlu0 %583
    %v586 = vmul.f32 %v569, %v584
    %s587 = scalar_lea.vmem [#allocation2], 32
    %v588 = vld [vmem:[%s587] sm:$0xff]
    %590 = vrot.lane.b32.xlu0 %v586, 64
    %v591 = vpop.permute.xlu0 %590
    %v592 = vsel %vm37, %v591, 0
    %594 = vmatprep.subr.mxu0 0.0
    %595 = vmatpush1.msra.mxu0 %v175
    %596 = vmatprep.subr.mxu0 0.0
    %597 = vmatpush1.msra.mxu0 %v176
    %598 = vmatprep.subr.mxu0 0.0
    %599 = vmatpush1.msra.mxu0 %v177
    %600 = vmatprep.subr.mxu0 0.0
    %601 = vmatpush1.msra.mxu0 %v178
    %602 = vmatprep.subr.mxu0 0.0
    %603 = vmatpush1.msra.mxu0 0.0
    %604 = vmatprep.subr.mxu0 0.0
    %605 = vmatpush1.msra.mxu0 0.0
    %606 = vmatprep.subr.mxu0 0.0
    %607 = vmatpush1.msra.mxu0 0.0
    %608 = vmatprep.subr.mxu0 0.0
    %609 = vmatpush1.msra.mxu0 0.0
    %610 = vmatprep.subr.mxu0 0.0
    %611 = vmatpush1.msra.mxu0 0.0
    %612 = vmatprep.subr.mxu0 0.0
    %613 = vmatpush1.msra.mxu0 0.0
    %614 = vmatprep.subr.mxu0 0.0
    %615 = vmatpush1.msra.mxu0 0.0
    %616 = vmatprep.subr.mxu0 0.0
    %617 = vmatpush1.msra.mxu0 0.0
    %618 = vmatprep.subr.mxu0 0.0
    %619 = vmatpush1.msra.mxu0 0.0
    %620 = vmatprep.subr.mxu0 0.0
    %621 = vmatpush1.msra.mxu0 0.0
    %622 = vmatprep.subr.mxu0 0.0
    %623 = vmatpush1.msra.mxu0 0.0
    %624 = vmatprep.subr.mxu0 0.0
    %625 = vmatpush1.msra.mxu0 0.0
    %626 = vmatprep.subr.mxu0 0.0
    %627 = vmatpush1.msra.mxu0 0.0
    %628 = vmatprep.subr.mxu0 0.0
    %629 = vmatpush1.msra.mxu0 0.0
    %630 = vmatprep.subr.mxu0 0.0
    %631 = vmatpush1.msra.mxu0 0.0
    %632 = vmatprep.subr.mxu0 0.0
    %633 = vmatpush1.msra.mxu0 0.0
    %634 = vmatprep.subr.mxu0 0.0
    %635 = vmatpush1.msra.mxu0 0.0
    %636 = vmatprep.subr.mxu0 0.0
    %637 = vmatpush1.msra.mxu0 0.0
    %638 = vmatprep.subr.mxu0 0.0
    %639 = vmatpush1.msra.mxu0 0.0
    %640 = vmatprep.subr.mxu0 0.0
    %641 = vmatpush1.msra.mxu0 0.0
    %642 = vmatprep.subr.mxu0 0.0
    %643 = vmatpush1.msra.mxu0 0.0
    %644 = vmatprep.subr.mxu0 0.0
    %645 = vmatpush1.msra.mxu0 0.0
    %646 = vmatprep.subr.mxu0 0.0
    %647 = vmatpush1.msra.mxu0 0.0
    %648 = vmatprep.subr.mxu0 0.0
    %649 = vmatpush1.msra.mxu0 0.0
    %650 = vmatprep.subr.mxu0 0.0
    %651 = vmatpush1.msra.mxu0 0.0
    %652 = vmatprep.subr.mxu0 0.0
    %653 = vmatpush1.msra.mxu0 0.0
    %654 = vmatprep.subr.mxu0 0.0
    %655 = vmatpush1.msra.mxu0 0.0
    %656 = vmatprep.subr.mxu0 0.0
    %657 = vmatpush1.msra.mxu0 0.0
    %658 = vmatprep.mubr.f32.mxu0 0.0
    %659 = vmatmul.mubr.f32.gmra.mrb[0].mxu0 %v592
    %v660 = vpop.f32.mrb[0].mxu0
    %v661 = vadd.f32 0.0, %v660
    %v662 = vpop.f32.mrb[0].mxu0
    %663 = vdwg.mxu0
    %v664 = vadd.f32 %v588, %v661
    %v665 = vsub.f32 0.0, %v664
    %v666 = vmul.f32 %v665, 1.442695
    %v667 = vpow.pop %v666
    %v668 = vadd.f32 %v667, 1.0
    %v669 = vrcp.pop %v668
    %v670 = vtanh.pop %v664
    %v671 = vsel %vm181, %v669, %v670
    %v672 = vmul.f32 %v671, %v580
    %674 = vrot.lane.b32.xlu0 %v671, 32
    %v675 = vpop.permute.xlu0 %674
    %v677 = vmul.f32 %v671, %v675
    %679 = vrot.lane.b32.xlu0 %v677, 32
    %v680 = vpop.permute.xlu0 %679
    %v682 = vadd.f32 %v672, %v680
    %v683 = vtanh.pop %v682
    %685 = vrot.lane.b32.xlu0 %v683, 32
    %v686 = vpop.permute.xlu0 %685
    %v688 = vmul.f32 %v671, %v686
    %s689 = scalar_lea.vmem [#allocation2], 40
    %v690 = vld [vmem:[%s689] sm:$0xff]
    %692 = vrot.lane.b32.xlu0 %v688, 64
    %v693 = vpop.permute.xlu0 %692
    %v694 = vsel %vm37, %v693, 0
    %696 = vmatprep.subr.mxu0 0.0
    %697 = vmatpush1.msra.mxu0 %v175
    %698 = vmatprep.subr.mxu0 0.0
    %699 = vmatpush1.msra.mxu0 %v176
    %700 = vmatprep.subr.mxu0 0.0
    %701 = vmatpush1.msra.mxu0 %v177
    %702 = vmatprep.subr.mxu0 0.0
    %703 = vmatpush1.msra.mxu0 %v178
    %704 = vmatprep.subr.mxu0 0.0
    %705 = vmatpush1.msra.mxu0 0.0
    %706 = vmatprep.subr.mxu0 0.0
    %707 = vmatpush1.msra.mxu0 0.0
    %708 = vmatprep.subr.mxu0 0.0
    %709 = vmatpush1.msra.mxu0 0.0
    %710 = vmatprep.subr.mxu0 0.0
    %711 = vmatpush1.msra.mxu0 0.0
    %712 = vmatprep.subr.mxu0 0.0
    %713 = vmatpush1.msra.mxu0 0.0
    %714 = vmatprep.subr.mxu0 0.0
    %715 = vmatpush1.msra.mxu0 0.0
    %716 = vmatprep.subr.mxu0 0.0
    %717 = vmatpush1.msra.mxu0 0.0
    %718 = vmatprep.subr.mxu0 0.0
    %719 = vmatpush1.msra.mxu0 0.0
    %720 = vmatprep.subr.mxu0 0.0
    %721 = vmatpush1.msra.mxu0 0.0
    %722 = vmatprep.subr.mxu0 0.0
    %723 = vmatpush1.msra.mxu0 0.0
    %724 = vmatprep.subr.mxu0 0.0
    %725 = vmatpush1.msra.mxu0 0.0
    %726 = vmatprep.subr.mxu0 0.0
    %727 = vmatpush1.msra.mxu0 0.0
    %728 = vmatprep.subr.mxu0 0.0
    %729 = vmatpush1.msra.mxu0 0.0
    %730 = vmatprep.subr.mxu0 0.0
    %731 = vmatpush1.msra.mxu0 0.0
    %732 = vmatprep.subr.mxu0 0.0
    %733 = vmatpush1.msra.mxu0 0.0
    %734 = vmatprep.subr.mxu0 0.0
    %735 = vmatpush1.msra.mxu0 0.0
    %736 = vmatprep.subr.mxu0 0.0
    %737 = vmatpush1.msra.mxu0 0.0
    %738 = vmatprep.subr.mxu0 0.0
    %739 = vmatpush1.msra.mxu0 0.0
    %740 = vmatprep.subr.mxu0 0.0
    %741 = vmatpush1.msra.mxu0 0.0
    %742 = vmatprep.subr.mxu0 0.0
    %743 = vmatpush1.msra.mxu0 0.0
    %744 = vmatprep.subr.mxu0 0.0
    %745 = vmatpush1.msra.mxu0 0.0
    %746 = vmatprep.subr.mxu0 0.0
    %747 = vmatpush1.msra.mxu0 0.0
    %748 = vmatprep.subr.mxu0 0.0
    %749 = vmatpush1.msra.mxu0 0.0
    %750 = vmatprep.subr.mxu0 0.0
    %751 = vmatpush1.msra.mxu0 0.0
    %752 = vmatprep.subr.mxu0 0.0
    %753 = vmatpush1.msra.mxu0 0.0
    %754 = vmatprep.subr.mxu0 0.0
    %755 = vmatpush1.msra.mxu0 0.0
    %756 = vmatprep.subr.mxu0 0.0
    %757 = vmatpush1.msra.mxu0 0.0
    %758 = vmatprep.subr.mxu0 0.0
    %759 = vmatpush1.msra.mxu0 0.0
    %760 = vmatprep.mubr.f32.mxu0 0.0
    %761 = vmatmul.mubr.f32.gmra.mrb[0].mxu0 %v694
    %v762 = vpop.f32.mrb[0].mxu0
    %v763 = vadd.f32 0.0, %v762
    %v764 = vpop.f32.mrb[0].mxu0
    %765 = vdwg.mxu0
    %v766 = vadd.f32 %v690, %v763
    %v767 = vsub.f32 0.0, %v766
    %v768 = vmul.f32 %v767, 1.442695
    %v769 = vpow.pop %v768
    %v770 = vadd.f32 %v769, 1.0
    %v771 = vrcp.pop %v770
    %v772 = vtanh.pop %v766
    %v773 = vsel %vm181, %v771, %v772
    %v774 = vmul.f32 %v773, %v682
    %776 = vrot.lane.b32.xlu0 %v773, 32
    %v777 = vpop.permute.xlu0 %776
    %v779 = vmul.f32 %v773, %v777
    %781 = vrot.lane.b32.xlu0 %v779, 32
    %v782 = vpop.permute.xlu0 %781
    %v784 = vadd.f32 %v774, %v782
    %v785 = vtanh.pop %v784
    %787 = vrot.lane.b32.xlu0 %v785, 32
    %v788 = vpop.permute.xlu0 %787
    %v790 = vmul.f32 %v773, %v788
    %s791 = scalar_lea.vmem [#allocation2], 48
    %v792 = vld [vmem:[%s791] sm:$0xff]
    %794 = vrot.lane.b32.xlu0 %v790, 64
    %v795 = vpop.permute.xlu0 %794
    %v796 = vsel %vm37, %v795, 0
    %798 = vmatprep.subr.mxu0 0.0
    %799 = vmatpush1.msra.mxu0 %v175
    %800 = vmatprep.subr.mxu0 0.0
    %801 = vmatpush1.msra.mxu0 %v176
    %802 = vmatprep.subr.mxu0 0.0
    %803 = vmatpush1.msra.mxu0 %v177
    %804 = vmatprep.subr.mxu0 0.0
    %805 = vmatpush1.msra.mxu0 %v178
    %806 = vmatprep.subr.mxu0 0.0
    %807 = vmatpush1.msra.mxu0 0.0
    %808 = vmatprep.subr.mxu0 0.0
    %809 = vmatpush1.msra.mxu0 0.0
    %810 = vmatprep.subr.mxu0 0.0
    %811 = vmatpush1.msra.mxu0 0.0
    %812 = vmatprep.subr.mxu0 0.0
    %813 = vmatpush1.msra.mxu0 0.0
    %814 = vmatprep.subr.mxu0 0.0
    %815 = vmatpush1.msra.mxu0 0.0
    %816 = vmatprep.subr.mxu0 0.0
    %817 = vmatpush1.msra.mxu0 0.0
    %818 = vmatprep.subr.mxu0 0.0
    %819 = vmatpush1.msra.mxu0 0.0
    %820 = vmatprep.subr.mxu0 0.0
    %821 = vmatpush1.msra.mxu0 0.0
    %822 = vmatprep.subr.mxu0 0.0
    %823 = vmatpush1.msra.mxu0 0.0
    %824 = vmatprep.subr.mxu0 0.0
    %825 = vmatpush1.msra.mxu0 0.0
    %826 = vmatprep.subr.mxu0 0.0
    %827 = vmatpush1.msra.mxu0 0.0
    %828 = vmatprep.subr.mxu0 0.0
    %829 = vmatpush1.msra.mxu0 0.0
    %830 = vmatprep.subr.mxu0 0.0
    %831 = vmatpush1.msra.mxu0 0.0
    %832 = vmatprep.subr.mxu0 0.0
    %833 = vmatpush1.msra.mxu0 0.0
    %834 = vmatprep.subr.mxu0 0.0
    %835 = vmatpush1.msra.mxu0 0.0
    %836 = vmatprep.subr.mxu0 0.0
    %837 = vmatpush1.msra.mxu0 0.0
    %838 = vmatprep.subr.mxu0 0.0
    %839 = vmatpush1.msra.mxu0 0.0
    %840 = vmatprep.subr.mxu0 0.0
    %841 = vmatpush1.msra.mxu0 0.0
    %842 = vmatprep.subr.mxu0 0.0
    %843 = vmatpush1.msra.mxu0 0.0
    %844 = vmatprep.subr.mxu0 0.0
    %845 = vmatpush1.msra.mxu0 0.0
    %846 = vmatprep.subr.mxu0 0.0
    %847 = vmatpush1.msra.mxu0 0.0
    %848 = vmatprep.subr.mxu0 0.0
    %849 = vmatpush1.msra.mxu0 0.0
    %850 = vmatprep.subr.mxu0 0.0
    %851 = vmatpush1.msra.mxu0 0.0
    %852 = vmatprep.subr.mxu0 0.0
    %853 = vmatpush1.msra.mxu0 0.0
    %854 = vmatprep.subr.mxu0 0.0
    %855 = vmatpush1.msra.mxu0 0.0
    %856 = vmatprep.subr.mxu0 0.0
    %857 = vmatpush1.msra.mxu0 0.0
    %858 = vmatprep.subr.mxu0 0.0
    %859 = vmatpush1.msra.mxu0 0.0
    %860 = vmatprep.subr.mxu0 0.0
    %861 = vmatpush1.msra.mxu0 0.0
    %862 = vmatprep.mubr.f32.mxu0 0.0
    %863 = vmatmul.mubr.f32.gmra.mrb[0].mxu0 %v796
    %v864 = vpop.f32.mrb[0].mxu0
    %v865 = vadd.f32 0.0, %v864
    %v866 = vpop.f32.mrb[0].mxu0
    %867 = vdwg.mxu0
    %v868 = vadd.f32 %v792, %v865
    %v869 = vsub.f32 0.0, %v868
    %v870 = vmul.f32 %v869, 1.442695
    %v871 = vpow.pop %v870
    %v872 = vadd.f32 %v871, 1.0
    %v873 = vrcp.pop %v872
    %v874 = vtanh.pop %v868
    %v875 = vsel %vm181, %v873, %v874
    %v876 = vmul.f32 %v875, %v784
    %878 = vrot.lane.b32.xlu0 %v875, 32
    %v879 = vpop.permute.xlu0 %878
    %v881 = vmul.f32 %v875, %v879
    %883 = vrot.lane.b32.xlu0 %v881, 32
    %v884 = vpop.permute.xlu0 %883
    %v886 = vadd.f32 %v876, %v884
    %v887 = vtanh.pop %v886
    %889 = vrot.lane.b32.xlu0 %v887, 32
    %v890 = vpop.permute.xlu0 %889
    %v892 = vmul.f32 %v875, %v890
    %s893 = scalar_lea.vmem [#allocation2], 56
    %v894 = vld [vmem:[%s893] sm:$0xff]
    %896 = vrot.lane.b32.xlu0 %v892, 64
    %v897 = vpop.permute.xlu0 %896
    %v898 = vsel %vm37, %v897, 0
    %900 = vmatprep.subr.mxu0 0.0
    %901 = vmatpush1.msra.mxu0 %v175
    %902 = vmatprep.subr.mxu0 0.0
    %903 = vmatpush1.msra.mxu0 %v176
    %904 = vmatprep.subr.mxu0 0.0
    %905 = vmatpush1.msra.mxu0 %v177
    %906 = vmatprep.subr.mxu0 0.0
    %907 = vmatpush1.msra.mxu0 %v178
    %908 = vmatprep.subr.mxu0 0.0
    %909 = vmatpush1.msra.mxu0 0.0
    %910 = vmatprep.subr.mxu0 0.0
    %911 = vmatpush1.msra.mxu0 0.0
    %912 = vmatprep.subr.mxu0 0.0
    %913 = vmatpush1.msra.mxu0 0.0
    %914 = vmatprep.subr.mxu0 0.0
    %915 = vmatpush1.msra.mxu0 0.0
    %916 = vmatprep.subr.mxu0 0.0
    %917 = vmatpush1.msra.mxu0 0.0
    %918 = vmatprep.subr.mxu0 0.0
    %919 = vmatpush1.msra.mxu0 0.0
    %920 = vmatprep.subr.mxu0 0.0
    %921 = vmatpush1.msra.mxu0 0.0
    %922 = vmatprep.subr.mxu0 0.0
    %923 = vmatpush1.msra.mxu0 0.0
    %924 = vmatprep.subr.mxu0 0.0
    %925 = vmatpush1.msra.mxu0 0.0
    %926 = vmatprep.subr.mxu0 0.0
    %927 = vmatpush1.msra.mxu0 0.0
    %928 = vmatprep.subr.mxu0 0.0
    %929 = vmatpush1.msra.mxu0 0.0
    %930 = vmatprep.subr.mxu0 0.0
    %931 = vmatpush1.msra.mxu0 0.0
    %932 = vmatprep.subr.mxu0 0.0
    %933 = vmatpush1.msra.mxu0 0.0
    %934 = vmatprep.subr.mxu0 0.0
    %935 = vmatpush1.msra.mxu0 0.0
    %936 = vmatprep.subr.mxu0 0.0
    %937 = vmatpush1.msra.mxu0 0.0
    %938 = vmatprep.subr.mxu0 0.0
    %939 = vmatpush1.msra.mxu0 0.0
    %940 = vmatprep.subr.mxu0 0.0
    %941 = vmatpush1.msra.mxu0 0.0
    %942 = vmatprep.subr.mxu0 0.0
    %943 = vmatpush1.msra.mxu0 0.0
    %944 = vmatprep.subr.mxu0 0.0
    %945 = vmatpush1.msra.mxu0 0.0
    %946 = vmatprep.subr.mxu0 0.0
    %947 = vmatpush1.msra.mxu0 0.0
    %948 = vmatprep.subr.mxu0 0.0
    %949 = vmatpush1.msra.mxu0 0.0
    %950 = vmatprep.subr.mxu0 0.0
    %951 = vmatpush1.msra.mxu0 0.0
    %952 = vmatprep.subr.mxu0 0.0
    %953 = vmatpush1.msra.mxu0 0.0
    %954 = vmatprep.subr.mxu0 0.0
    %955 = vmatpush1.msra.mxu0 0.0
    %956 = vmatprep.subr.mxu0 0.0
    %957 = vmatpush1.msra.mxu0 0.0
    %958 = vmatprep.subr.mxu0 0.0
    %959 = vmatpush1.msra.mxu0 0.0
    %960 = vmatprep.subr.mxu0 0.0
    %961 = vmatpush1.msra.mxu0 0.0
    %962 = vmatprep.subr.mxu0 0.0
    %963 = vmatpush1.msra.mxu0 0.0
    %964 = vmatprep.mubr.f32.mxu0 0.0
    %965 = vmatmul.mubr.f32.gmra.mrb[0].mxu0 %v898
    %v966 = vpop.f32.mrb[0].mxu0
    %v967 = vadd.f32 0.0, %v966
    %v968 = vpop.f32.mrb[0].mxu0
    %969 = vdwg.mxu0
    %v970 = vadd.f32 %v894, %v967
    %v971 = vsub.f32 0.0, %v970
    %v972 = vmul.f32 %v971, 1.442695
    %v973 = vpow.pop %v972
    %v974 = vadd.f32 %v973, 1.0
    %v975 = vrcp.pop %v974
    %v976 = vtanh.pop %v970
    %v977 = vsel %vm181, %v975, %v976
    %v978 = vmul.f32 %v977, %v886
    %980 = vrot.lane.b32.xlu0 %v977, 32
    %v981 = vpop.permute.xlu0 %980
    %v983 = vmul.f32 %v977, %v981
    %985 = vrot.lane.b32.xlu0 %v983, 32
    %v986 = vpop.permute.xlu0 %985
    %v988 = vadd.f32 %v978, %v986
    %v989 = vtanh.pop %v988
    %991 = vrot.lane.b32.xlu0 %v989, 32
    %v992 = vpop.permute.xlu0 %991
    %v994 = vmul.f32 %v977, %v992
    %v995 = vmax.f32 %v994, 0.0
    %997 = vrot.lane.b32.xlu0 %v995, 64
    %v998 = vpop.permute.xlu0 %997
    %1000 = vst.msk [vmem:[#allocation3] sm:$0xff] %vm37, %v998
    // Predicated region
    $region18: #{tpu_custom_call.1} parent=1 // pred_check
      _
    $region19: #{tpu_custom_call.1} parent=1 // pred_check_branch
      %1002 = sbr.rel (0) target = $region21
    $region20: #{tpu_custom_call.1} parent=1 // pred_region
      %s1004 = ssub.s32 128, 128
      %1005 = vsyncadd [#allocation4], %s1004
      %s1007 = sshll.u32 [#allocation3], 4
      %s1008 = int_to_ptr.vmem [resolvable:$true] %s1007
      %1010 = dma.vmem_to_hbm [thread:$0]  %s1008, 128, %s4, [#allocation4]
    $region21: #{tpu_custom_call.1} parent=1 // pred_fallthru
      _
    // Predicated region
    $region22: #{tpu_custom_call.1} parent=1 // pred_check
      _
    $region23: #{tpu_custom_call.1} parent=1 // pred_check_branch
      %1012 = sbr.rel (0) target = $region25
    $region24: #{tpu_custom_call.1} parent=1 // pred_region
      %1013 = dma.done [#allocation4], 128
    $region25: #{tpu_custom_call.1} parent=1 // pred_fallthru
      _
    %1014 = vsyncpa [#allocation4], 1

</llo_original>
